<compile_context>
chip_gen: v5e
topology: v5e:2x2
jax: 0.10.0
libtpu: 0.0.40
codegen_flags: <defaults>
</compile_context>

<pallas_src>
import jax
import jax.numpy as jnp
from jax import lax
from jax.experimental import pallas as pl
from jax.experimental.pallas import tpu as pltpu

# ---- model hyper-parameters (synthetic, small) ----
C_IN = 3                              # RGB (PIXEL_MEAN / PIXEL_STD have 3 entries)
H = W = 16
PATCH = 2
HF, WF = H // PATCH, W // PATCH
N_TOK = HF * WF                       # 64 tokens
P_DIM = PATCH * PATCH * C_IN          # 12
D_FEAT = 32
K_BASES = 8
EM_ITERS = 3
NUM_CLASSES = 4
C_PAD8 = 8                            # classes padded to one sublane group
EPS = 1e-6


def ema_seg_kernel(patches_ref, w_emb_ref, b_emb_ref, mu0_ref,
                   w_cls_ref, b_cls_ref, out_ref):
    """One batch tile (TB images) per grid step, token-on-lanes layout:
    features (TB, D, N), responsibilities (TB, K, N), bases (TB, K, D)."""
    tb = patches_ref.shape[0]

    # bf16 only at the DMA boundary; all in-kernel math in f32 (v5e-safe).
    x = patches_ref[...].astype(jnp.float32)                       # (TB, P, N)

    # ---- backbone: patch embedding, pixel normalization folded into weights
    # (x - mean)/std @ W  ==  x @ (W/std) + (-(mean/std) @ W)
    w_emb_b = jnp.broadcast_to(w_emb_ref[...][None], (tb, D_FEAT, P_DIM))
    f = jnp.einsum('bdp,bpn->bdn', w_emb_b, x,
                   preferred_element_type=jnp.float32)             # (TB, D, N)
    f = f + b_emb_ref[...][None]                                   # (1, D, 1) bcast

    # ---- EMA head: EM iterations over K bases (per-image statistics) ----
    mu = jnp.broadcast_to(mu0_ref[...][None], (tb, K_BASES, D_FEAT))  # (TB,K,D)
    z = None
    for _ in range(EM_ITERS):
        # E-step: responsibilities; softmax over K is an 8-deep sublane reduce.
        att = jnp.einsum('bkd,bdn->bkn', mu, f,
                         preferred_element_type=jnp.float32)       # (TB, K, N)
        att = att - jnp.max(att, axis=1, keepdims=True)
        e = jnp.exp(att)
        z = e / jnp.sum(e, axis=1, keepdims=True)                  # exact softmax
        # M-step without materializing z_norm:
        #   mu = (z contracted with f over tokens) / (sum_n z + eps)
        mu_num = jnp.einsum('bkn,bdn->bkd', z, f,
                            preferred_element_type=jnp.float32)    # (TB, K, D)
        z_colsum = jnp.sum(z, axis=2, keepdims=True)               # (TB, K, 1)
        mu = mu_num * pl.reciprocal(z_colsum + EPS, approx=True)
        # l2-normalize bases along the channel axis (rsqrt -> EUP)
        mu = mu * lax.rsqrt(jnp.sum(mu * mu, axis=2, keepdims=True) + EPS)

    # reconstruction + residual + ReLU
    f_rec = jnp.einsum('bkd,bkn->bdn', mu, z,
                       preferred_element_type=jnp.float32)         # (TB, D, N)
    feat = jnp.maximum(f + f_rec, 0.0)

    # ---- classifier (1x1 conv == linear), classes on sublanes (pad 4 -> 8)
    w_cls_b = jnp.broadcast_to(w_cls_ref[...][None], (tb, C_PAD8, D_FEAT))
    logits = jnp.einsum('bcd,bdn->bcn', w_cls_b, feat,
                        preferred_element_type=jnp.float32)        # (TB, 8, N)
    out_ref[...] = logits + b_cls_ref[...][None]


def ema_segmentor_forward(images_nchw, params, batch_tile=64, min_grid_blocks=1):
    """images_nchw: (B, C_IN, H, W) float32 (PyTorch NCHW convention).
    Returns per-pixel class logits (B, NUM_CLASSES, H, W).

    batch_tile: as large as VMEM allows (per-step pipeline overhead dominates
      at small tiles).  64 is safe on all gens with the 32 MiB vmem limit set
      below; 128 also fits on v6e/v7x.
    min_grid_blocks: set to 2 on v7x with large B so the "parallel" grid axis
      can shard across both TensorCores."""
    B = images_nchw.shape[0]
    TB = max(1, min(batch_tile, pl.cdiv(B, max(1, min_grid_blocks))))
    n_blocks = pl.cdiv(B, TB)
    B_pad = n_blocks * TB

    # --- glue: NCHW -> (B, P_DIM, N_TOK) patch tokens (tokens on lanes) ---
    x = jnp.transpose(images_nchw, (0, 2, 3, 1))                   # (B, H, W, C)
    x = x.reshape(B, HF, PATCH, WF, PATCH, C_IN)
    x = jnp.transpose(x, (0, 1, 3, 2, 4, 5))                       # (B,HF,WF,ph,pw,C)
    patches = x.reshape(B, N_TOK, P_DIM)
    patches = jnp.transpose(patches, (0, 2, 1))                    # (B, P, N)
    if B_pad != B:
        patches = jnp.pad(patches, ((0, B_pad - B), (0, 0), (0, 0)))
    patches = patches.astype(jnp.bfloat16)                         # bf16 DMA boundary

    # --- fold (x - mean)/std into the embedding weights (exact affine fold) ---
    mean_p = jnp.tile(params["pixel_mean"], PATCH * PATCH)         # (P,)
    std_p = jnp.tile(params["pixel_std"], PATCH * PATCH)           # (P,)
    w_emb_n = params["w_emb"] * (1.0 / std_p)[:, None]             # (P, D)
    w_emb_t = jnp.transpose(w_emb_n)                               # (D, P)
    b_emb = (-(mean_p / std_p) @ params["w_emb"]).reshape(D_FEAT, 1)

    mu0_t = jnp.transpose(params["mu0"])                           # (K, D)

    # --- classes padded 4 -> 8 on sublanes (2x, vs 32x lane padding before) ---
    w_cls_t = jnp.zeros((C_PAD8, D_FEAT), jnp.float32)
    w_cls_t = w_cls_t.at[:NUM_CLASSES].set(jnp.transpose(params["w_cls"]))
    b_cls = jnp.zeros((C_PAD8, 1), jnp.float32)
    b_cls = b_cls.at[:NUM_CLASSES, 0].set(params["b_cls"].reshape(-1))

    out = pl.pallas_call(
        ema_seg_kernel,
        out_shape=jax.ShapeDtypeStruct((B_pad, C_PAD8, N_TOK), jnp.float32),
        grid=(n_blocks,),
        in_specs=[
            pl.BlockSpec((TB, P_DIM, N_TOK), lambda i: (i, 0, 0)),
            pl.BlockSpec((D_FEAT, P_DIM), lambda i: (0, 0)),
            pl.BlockSpec((D_FEAT, 1), lambda i: (0, 0)),
            pl.BlockSpec((K_BASES, D_FEAT), lambda i: (0, 0)),
            pl.BlockSpec((C_PAD8, D_FEAT), lambda i: (0, 0)),
            pl.BlockSpec((C_PAD8, 1), lambda i: (0, 0)),
        ],
        out_specs=pl.BlockSpec((TB, C_PAD8, N_TOK), lambda i: (i, 0, 0)),
        compiler_params=pltpu.CompilerParams(
            dimension_semantics=("parallel",),
            vmem_limit_bytes=32 * 1024 * 1024),   # covers v5e's 16 MiB default
    )(patches, w_emb_t, b_emb, mu0_t, w_cls_t, b_cls)

    # --- glue: drop pad rows/classes, tokens -> (B,NC,HF,WF), bilinear upsample
    logits_lr = out[:B, :NUM_CLASSES, :].reshape(B, NUM_CLASSES, HF, WF)
    logits_hr = jax.image.resize(logits_lr, (B, NUM_CLASSES, H, W),
                                 method="bilinear")
    return logits_hr                                               # NCHW "sem_seg"


def init_params(key):
    k1, k2, k3 = jax.random.split(key, 3)
    return {
        "pixel_mean": jnp.array([123.675, 116.28, 103.53], jnp.float32),
        "pixel_std": jnp.array([58.395, 57.12, 57.375], jnp.float32),
        "w_emb": jax.random.normal(k1, (P_DIM, D_FEAT), jnp.float32) * 0.05,
        "mu0": jax.random.normal(k2, (D_FEAT, K_BASES), jnp.float32) * 0.1,
        "w_cls": jax.random.normal(k3, (D_FEAT, NUM_CLASSES), jnp.float32) * 0.05,
        "b_cls": jnp.zeros((1, NUM_CLASSES), jnp.float32),
    }


if __name__ == "__main__":
    key = jax.random.PRNGKey(0)
    kx, kp = jax.random.split(key)
    # synthetic batch of images, NCHW like the PyTorch DatasetMapper output
    images = jax.random.uniform(kx, (2, C_IN, H, W), jnp.float32, 0.0, 255.0)
    params = init_params(kp)

    # TODO(synk): per-image cropping in sem_seg_postprocess (image_sizes),
    # ImageList size_divisibility padding, and the training-mode loss branch
    # are dataset/loop glue, not kernel work.
    result = ema_segmentor_forward(images, params)
    jax.block_until_ready(result)
    assert result.shape == (2, NUM_CLASSES, H, W)
    assert bool(jnp.all(jnp.isfinite(result)))
    print("KERNEL_OK")
</pallas_src>

<mosaic_0001>
module attributes {stable_mosaic.version = 11 : i64} {
  func.func @ema_seg_kernel(%arg0: i32, %arg1: memref<2x12x64xbf16, #tpu.memory_space<vmem>>, %arg2: memref<32x12xf32, #tpu.memory_space<vmem>>, %arg3: memref<32x1xf32, #tpu.memory_space<vmem>>, %arg4: memref<8x32xf32, #tpu.memory_space<vmem>>, %arg5: memref<8x32xf32, #tpu.memory_space<vmem>>, %arg6: memref<8x1xf32, #tpu.memory_space<vmem>>, %arg7: memref<2x8x64xf32, #tpu.memory_space<vmem>>) attributes {dimension_semantics = [#tpu.dimension_semantics<parallel>], iteration_bounds = array<i64: 1>, scalar_prefetch = 0 : i64, scratch_operands = 0 : i64, tpu.core_type = #tpu.core_type<tc>, window_params = [{transform_indices = @transform_0, window_bounds = array<i64: 2, 12, 64>}, {pipeline_mode = #tpu.pipeline_mode<synchronous>, transform_indices = @transform_1, window_bounds = array<i64: 32, 12>}, {pipeline_mode = #tpu.pipeline_mode<synchronous>, transform_indices = @transform_2, window_bounds = array<i64: 32, 1>}, {pipeline_mode = #tpu.pipeline_mode<synchronous>, transform_indices = @transform_3, window_bounds = array<i64: 8, 32>}, {pipeline_mode = #tpu.pipeline_mode<synchronous>, transform_indices = @transform_4, window_bounds = array<i64: 8, 32>}, {pipeline_mode = #tpu.pipeline_mode<synchronous>, transform_indices = @transform_5, window_bounds = array<i64: 8, 1>}, {transform_indices = @transform_6, window_bounds = array<i64: 2, 8, 64>}]} {
    %c0 = arith.constant 0 : index
    %c0_0 = arith.constant 0 : index
    %c0_1 = arith.constant 0 : index
    %0 = vector.load %arg1[%c0, %c0_0, %c0_1] : memref<2x12x64xbf16, #tpu.memory_space<vmem>>, vector<2x12x64xbf16>
    %1 = arith.extf %0 : vector<2x12x64xbf16> to vector<2x12x64xf32>
    %c0_2 = arith.constant 0 : index
    %c0_3 = arith.constant 0 : index
    %2 = vector.load %arg2[%c0_2, %c0_3] : memref<32x12xf32, #tpu.memory_space<vmem>>, vector<32x12xf32>
    %3 = vector.shape_cast %2 : vector<32x12xf32> to vector<1x32x12xf32>
    %4 = vector.shape_cast %3 : vector<1x32x12xf32> to vector<1x32x12xf32>
    %5 = vector.broadcast %4 : vector<1x32x12xf32> to vector<2x32x12xf32>
    "tpu.trace_start"() <{level = 10 : i32, message = "bdp,bpn->bdn"}> : () -> ()
    %cst = arith.constant dense<0.000000e+00> : vector<2x32x64xf32>
    %6 = tpu.matmul %5, %1, %cst {dimension_numbers = #tpu.dot_dimension_numbers<[2], [1], [1], [2], [0, 0, 0, 1, 1, 2], [0], [0]>} : vector<2x32x12xf32>, vector<2x12x64xf32>, vector<2x32x64xf32> -> vector<2x32x64xf32>
    "tpu.trace_stop"() : () -> ()
    %c0_4 = arith.constant 0 : index
    %c0_5 = arith.constant 0 : index
    %7 = vector.load %arg3[%c0_4, %c0_5] : memref<32x1xf32, #tpu.memory_space<vmem>>, vector<32x1xf32>
    %8 = vector.shape_cast %7 : vector<32x1xf32> to vector<1x32x1xf32>
    %9 = vector.broadcast %8 : vector<1x32x1xf32> to vector<2x32x64xf32>
    %10 = arith.addf %6, %9 : vector<2x32x64xf32>
    %c0_6 = arith.constant 0 : index
    %c0_7 = arith.constant 0 : index
    %11 = vector.load %arg4[%c0_6, %c0_7] : memref<8x32xf32, #tpu.memory_space<vmem>>, vector<8x32xf32>
    %12 = vector.shape_cast %11 : vector<8x32xf32> to vector<1x8x32xf32>
    %13 = vector.shape_cast %12 : vector<1x8x32xf32> to vector<1x8x32xf32>
    %14 = vector.broadcast %13 : vector<1x8x32xf32> to vector<2x8x32xf32>
    "tpu.trace_start"() <{level = 10 : i32, message = "bkd,bdn->bkn"}> : () -> ()
    %cst_8 = arith.constant dense<0.000000e+00> : vector<2x8x64xf32>
    %15 = tpu.matmul %14, %10, %cst_8 {dimension_numbers = #tpu.dot_dimension_numbers<[2], [1], [1], [2], [0, 0, 0, 1, 1, 2], [0], [0]>} : vector<2x8x32xf32>, vector<2x32x64xf32>, vector<2x8x64xf32> -> vector<2x8x64xf32>
    "tpu.trace_stop"() : () -> ()
    %cst_9 = arith.constant dense<0xFF800000> : vector<2x64xf32>
    %16 = vector.multi_reduction <maximumf>, %15, %cst_9 [1] : vector<2x8x64xf32> to vector<2x64xf32>
    %17 = vector.shape_cast %16 : vector<2x64xf32> to vector<2x1x64xf32>
    %18 = vector.broadcast %17 : vector<2x1x64xf32> to vector<2x8x64xf32>
    %19 = arith.subf %15, %18 : vector<2x8x64xf32>
    %20 = math.exp %19 : vector<2x8x64xf32>
    %cst_10 = arith.constant dense<0.000000e+00> : vector<2x64xf32>
    %21 = vector.multi_reduction <add>, %20, %cst_10 [1] : vector<2x8x64xf32> to vector<2x64xf32>
    %22 = vector.shape_cast %21 : vector<2x64xf32> to vector<2x1x64xf32>
    %23 = vector.broadcast %22 : vector<2x1x64xf32> to vector<2x8x64xf32>
    %24 = arith.divf %20, %23 : vector<2x8x64xf32>
    "tpu.trace_start"() <{level = 10 : i32, message = "bkn,bdn->bkd"}> : () -> ()
    %cst_11 = arith.constant dense<0.000000e+00> : vector<2x8x32xf32>
    %25 = tpu.matmul %24, %10, %cst_11 {dimension_numbers = #tpu.dot_dimension_numbers<[2], [2], [1], [1], [0, 0, 0, 1, 1, 1], [0], [0]>} : vector<2x8x64xf32>, vector<2x32x64xf32>, vector<2x8x32xf32> -> vector<2x8x32xf32>
    "tpu.trace_stop"() : () -> ()
    %cst_12 = arith.constant dense<0.000000e+00> : vector<2x8xf32>
    %26 = vector.multi_reduction <add>, %24, %cst_12 [2] : vector<2x8x64xf32> to vector<2x8xf32>
    %27 = vector.shape_cast %26 : vector<2x8xf32> to vector<2x8x1xf32>
    %cst_13 = arith.constant 9.99999997E-7 : f32
    %28 = vector.broadcast %cst_13 : f32 to vector<2x8x1xf32>
    %29 = arith.addf %27, %28 : vector<2x8x1xf32>
    %30 = tpu.reciprocal %29 {approx = true} : vector<2x8x1xf32> -> vector<2x8x1xf32>
    %31 = vector.broadcast %30 : vector<2x8x1xf32> to vector<2x8x32xf32>
    %32 = arith.mulf %25, %31 : vector<2x8x32xf32>
    %33 = arith.mulf %32, %32 : vector<2x8x32xf32>
    %cst_14 = arith.constant dense<0.000000e+00> : vector<2x8xf32>
    %34 = vector.multi_reduction <add>, %33, %cst_14 [2] : vector<2x8x32xf32> to vector<2x8xf32>
    %35 = vector.shape_cast %34 : vector<2x8xf32> to vector<2x8x1xf32>
    %cst_15 = arith.constant 9.99999997E-7 : f32
    %36 = vector.broadcast %cst_15 : f32 to vector<2x8x1xf32>
    %37 = arith.addf %35, %36 : vector<2x8x1xf32>
    %38 = math.rsqrt %37 : vector<2x8x1xf32>
    %39 = vector.broadcast %38 : vector<2x8x1xf32> to vector<2x8x32xf32>
    %40 = arith.mulf %32, %39 : vector<2x8x32xf32>
    "tpu.trace_start"() <{level = 10 : i32, message = "bkd,bdn->bkn"}> : () -> ()
    %cst_16 = arith.constant dense<0.000000e+00> : vector<2x8x64xf32>
    %41 = tpu.matmul %40, %10, %cst_16 {dimension_numbers = #tpu.dot_dimension_numbers<[2], [1], [1], [2], [0, 0, 0, 1, 1, 2], [0], [0]>} : vector<2x8x32xf32>, vector<2x32x64xf32>, vector<2x8x64xf32> -> vector<2x8x64xf32>
    "tpu.trace_stop"() : () -> ()
    %cst_17 = arith.constant dense<0xFF800000> : vector<2x64xf32>
    %42 = vector.multi_reduction <maximumf>, %41, %cst_17 [1] : vector<2x8x64xf32> to vector<2x64xf32>
    %43 = vector.shape_cast %42 : vector<2x64xf32> to vector<2x1x64xf32>
    %44 = vector.broadcast %43 : vector<2x1x64xf32> to vector<2x8x64xf32>
    %45 = arith.subf %41, %44 : vector<2x8x64xf32>
    %46 = math.exp %45 : vector<2x8x64xf32>
    %cst_18 = arith.constant dense<0.000000e+00> : vector<2x64xf32>
    %47 = vector.multi_reduction <add>, %46, %cst_18 [1] : vector<2x8x64xf32> to vector<2x64xf32>
    %48 = vector.shape_cast %47 : vector<2x64xf32> to vector<2x1x64xf32>
    %49 = vector.broadcast %48 : vector<2x1x64xf32> to vector<2x8x64xf32>
    %50 = arith.divf %46, %49 : vector<2x8x64xf32>
    "tpu.trace_start"() <{level = 10 : i32, message = "bkn,bdn->bkd"}> : () -> ()
    %cst_19 = arith.constant dense<0.000000e+00> : vector<2x8x32xf32>
    %51 = tpu.matmul %50, %10, %cst_19 {dimension_numbers = #tpu.dot_dimension_numbers<[2], [2], [1], [1], [0, 0, 0, 1, 1, 1], [0], [0]>} : vector<2x8x64xf32>, vector<2x32x64xf32>, vector<2x8x32xf32> -> vector<2x8x32xf32>
    "tpu.trace_stop"() : () -> ()
    %cst_20 = arith.constant dense<0.000000e+00> : vector<2x8xf32>
    %52 = vector.multi_reduction <add>, %50, %cst_20 [2] : vector<2x8x64xf32> to vector<2x8xf32>
    %53 = vector.shape_cast %52 : vector<2x8xf32> to vector<2x8x1xf32>
    %cst_21 = arith.constant 9.99999997E-7 : f32
    %54 = vector.broadcast %cst_21 : f32 to vector<2x8x1xf32>
    %55 = arith.addf %53, %54 : vector<2x8x1xf32>
    %56 = tpu.reciprocal %55 {approx = true} : vector<2x8x1xf32> -> vector<2x8x1xf32>
    %57 = vector.broadcast %56 : vector<2x8x1xf32> to vector<2x8x32xf32>
    %58 = arith.mulf %51, %57 : vector<2x8x32xf32>
    %59 = arith.mulf %58, %58 : vector<2x8x32xf32>
    %cst_22 = arith.constant dense<0.000000e+00> : vector<2x8xf32>
    %60 = vector.multi_reduction <add>, %59, %cst_22 [2] : vector<2x8x32xf32> to vector<2x8xf32>
    %61 = vector.shape_cast %60 : vector<2x8xf32> to vector<2x8x1xf32>
    %cst_23 = arith.constant 9.99999997E-7 : f32
    %62 = vector.broadcast %cst_23 : f32 to vector<2x8x1xf32>
    %63 = arith.addf %61, %62 : vector<2x8x1xf32>
    %64 = math.rsqrt %63 : vector<2x8x1xf32>
    %65 = vector.broadcast %64 : vector<2x8x1xf32> to vector<2x8x32xf32>
    %66 = arith.mulf %58, %65 : vector<2x8x32xf32>
    "tpu.trace_start"() <{level = 10 : i32, message = "bkd,bdn->bkn"}> : () -> ()
    %cst_24 = arith.constant dense<0.000000e+00> : vector<2x8x64xf32>
    %67 = tpu.matmul %66, %10, %cst_24 {dimension_numbers = #tpu.dot_dimension_numbers<[2], [1], [1], [2], [0, 0, 0, 1, 1, 2], [0], [0]>} : vector<2x8x32xf32>, vector<2x32x64xf32>, vector<2x8x64xf32> -> vector<2x8x64xf32>
    "tpu.trace_stop"() : () -> ()
    %cst_25 = arith.constant dense<0xFF800000> : vector<2x64xf32>
    %68 = vector.multi_reduction <maximumf>, %67, %cst_25 [1] : vector<2x8x64xf32> to vector<2x64xf32>
    %69 = vector.shape_cast %68 : vector<2x64xf32> to vector<2x1x64xf32>
    %70 = vector.broadcast %69 : vector<2x1x64xf32> to vector<2x8x64xf32>
    %71 = arith.subf %67, %70 : vector<2x8x64xf32>
    %72 = math.exp %71 : vector<2x8x64xf32>
    %cst_26 = arith.constant dense<0.000000e+00> : vector<2x64xf32>
    %73 = vector.multi_reduction <add>, %72, %cst_26 [1] : vector<2x8x64xf32> to vector<2x64xf32>
    %74 = vector.shape_cast %73 : vector<2x64xf32> to vector<2x1x64xf32>
    %75 = vector.broadcast %74 : vector<2x1x64xf32> to vector<2x8x64xf32>
    %76 = arith.divf %72, %75 : vector<2x8x64xf32>
    "tpu.trace_start"() <{level = 10 : i32, message = "bkn,bdn->bkd"}> : () -> ()
    %cst_27 = arith.constant dense<0.000000e+00> : vector<2x8x32xf32>
    %77 = tpu.matmul %76, %10, %cst_27 {dimension_numbers = #tpu.dot_dimension_numbers<[2], [2], [1], [1], [0, 0, 0, 1, 1, 1], [0], [0]>} : vector<2x8x64xf32>, vector<2x32x64xf32>, vector<2x8x32xf32> -> vector<2x8x32xf32>
    "tpu.trace_stop"() : () -> ()
    %cst_28 = arith.constant dense<0.000000e+00> : vector<2x8xf32>
    %78 = vector.multi_reduction <add>, %76, %cst_28 [2] : vector<2x8x64xf32> to vector<2x8xf32>
    %79 = vector.shape_cast %78 : vector<2x8xf32> to vector<2x8x1xf32>
    %cst_29 = arith.constant 9.99999997E-7 : f32
    %80 = vector.broadcast %cst_29 : f32 to vector<2x8x1xf32>
    %81 = arith.addf %79, %80 : vector<2x8x1xf32>
    %82 = tpu.reciprocal %81 {approx = true} : vector<2x8x1xf32> -> vector<2x8x1xf32>
    %83 = vector.broadcast %82 : vector<2x8x1xf32> to vector<2x8x32xf32>
    %84 = arith.mulf %77, %83 : vector<2x8x32xf32>
    %85 = arith.mulf %84, %84 : vector<2x8x32xf32>
    %cst_30 = arith.constant dense<0.000000e+00> : vector<2x8xf32>
    %86 = vector.multi_reduction <add>, %85, %cst_30 [2] : vector<2x8x32xf32> to vector<2x8xf32>
    %87 = vector.shape_cast %86 : vector<2x8xf32> to vector<2x8x1xf32>
    %cst_31 = arith.constant 9.99999997E-7 : f32
    %88 = vector.broadcast %cst_31 : f32 to vector<2x8x1xf32>
    %89 = arith.addf %87, %88 : vector<2x8x1xf32>
    %90 = math.rsqrt %89 : vector<2x8x1xf32>
    %91 = vector.broadcast %90 : vector<2x8x1xf32> to vector<2x8x32xf32>
    %92 = arith.mulf %84, %91 : vector<2x8x32xf32>
    "tpu.trace_start"() <{level = 10 : i32, message = "bkd,bkn->bdn"}> : () -> ()
    %cst_32 = arith.constant dense<0.000000e+00> : vector<2x32x64xf32>
    %93 = tpu.matmul %92, %76, %cst_32 {dimension_numbers = #tpu.dot_dimension_numbers<[1], [1], [2], [2], [0, 0, 0, 2, 1, 2], [0], [0]>} : vector<2x8x32xf32>, vector<2x8x64xf32>, vector<2x32x64xf32> -> vector<2x32x64xf32>
    "tpu.trace_stop"() : () -> ()
    %94 = arith.addf %10, %93 : vector<2x32x64xf32>
    %cst_33 = arith.constant 0.000000e+00 : f32
    %95 = vector.broadcast %cst_33 : f32 to vector<2x32x64xf32>
    %96 = arith.maximumf %94, %95 : vector<2x32x64xf32>
    %c0_34 = arith.constant 0 : index
    %c0_35 = arith.constant 0 : index
    %97 = vector.load %arg5[%c0_34, %c0_35] : memref<8x32xf32, #tpu.memory_space<vmem>>, vector<8x32xf32>
    %98 = vector.shape_cast %97 : vector<8x32xf32> to vector<1x8x32xf32>
    %99 = vector.shape_cast %98 : vector<1x8x32xf32> to vector<1x8x32xf32>
    %100 = vector.broadcast %99 : vector<1x8x32xf32> to vector<2x8x32xf32>
    "tpu.trace_start"() <{level = 10 : i32, message = "bcd,bdn->bcn"}> : () -> ()
    %cst_36 = arith.constant dense<0.000000e+00> : vector<2x8x64xf32>
    %101 = tpu.matmul %100, %96, %cst_36 {dimension_numbers = #tpu.dot_dimension_numbers<[2], [1], [1], [2], [0, 0, 0, 1, 1, 2], [0], [0]>} : vector<2x8x32xf32>, vector<2x32x64xf32>, vector<2x8x64xf32> -> vector<2x8x64xf32>
    "tpu.trace_stop"() : () -> ()
    %c0_37 = arith.constant 0 : index
    %c0_38 = arith.constant 0 : index
    %102 = vector.load %arg6[%c0_37, %c0_38] : memref<8x1xf32, #tpu.memory_space<vmem>>, vector<8x1xf32>
    %103 = vector.shape_cast %102 : vector<8x1xf32> to vector<1x8x1xf32>
    %104 = vector.broadcast %103 : vector<1x8x1xf32> to vector<2x8x64xf32>
    %105 = arith.addf %101, %104 : vector<2x8x64xf32>
    %c0_39 = arith.constant 0 : index
    %c0_40 = arith.constant 0 : index
    %c0_41 = arith.constant 0 : index
    %106 = vector.load %arg7[%c0_39, %c0_40, %c0_41] : memref<2x8x64xf32, #tpu.memory_space<vmem>>, vector<2x8x64xf32>
    tpu.vector_store %arg7[%c0_39, %c0_40, %c0_41], %105 {strides = array<i32>} : memref<2x8x64xf32, #tpu.memory_space<vmem>>, vector<2x8x64xf32>,
    return
  }
  func.func @transform_0(%arg0: i32) -> (i32, i32, i32) {
    %c0_i32 = arith.constant 0 : i32
    %c0_i32_0 = arith.constant 0 : i32
    %c0_i32_1 = arith.constant 0 : i32
    return %arg0, %c0_i32, %c0_i32_0 : i32, i32, i32
  }
  func.func @transform_1(%arg0: i32) -> (i32, i32) {
    %c0_i32 = arith.constant 0 : i32
    %c0_i32_0 = arith.constant 0 : i32
    %c0_i32_1 = arith.constant 0 : i32
    return %c0_i32, %c0_i32_0 : i32, i32
  }
  func.func @transform_2(%arg0: i32) -> (i32, i32) {
    %c0_i32 = arith.constant 0 : i32
    %c0_i32_0 = arith.constant 0 : i32
    %c0_i32_1 = arith.constant 0 : i32
    return %c0_i32, %c0_i32_0 : i32, i32
  }
  func.func @transform_3(%arg0: i32) -> (i32, i32) {
    %c0_i32 = arith.constant 0 : i32
    %c0_i32_0 = arith.constant 0 : i32
    %c0_i32_1 = arith.constant 0 : i32
    return %c0_i32, %c0_i32_0 : i32, i32
  }
  func.func @transform_4(%arg0: i32) -> (i32, i32) {
    %c0_i32 = arith.constant 0 : i32
    %c0_i32_0 = arith.constant 0 : i32
    %c0_i32_1 = arith.constant 0 : i32
    return %c0_i32, %c0_i32_0 : i32, i32
  }
  func.func @transform_5(%arg0: i32) -> (i32, i32) {
    %c0_i32 = arith.constant 0 : i32
    %c0_i32_0 = arith.constant 0 : i32
    %c0_i32_1 = arith.constant 0 : i32
    return %c0_i32, %c0_i32_0 : i32, i32
  }
  func.func @transform_6(%arg0: i32) -> (i32, i32, i32) {
    %c0_i32 = arith.constant 0 : i32
    %c0_i32_0 = arith.constant 0 : i32
    %c0_i32_1 = arith.constant 0 : i32
    return %arg0, %c0_i32, %c0_i32_0 : i32, i32, i32
  }
}

</mosaic_0001>

<llo_original>
// kernel: tpu_custom_call.1
$region0: #{tpu_custom_call.1}
  #allocation0 [shape = 'u32[]', space=smem, size = 0x4, offset = 0x4, fixed_abs, tag = 'smem constant byte address 0x4 - core index']
  #allocation1 [shape = 'u32[72,128]{1,0:T(1,128)}', space=vmem, size = 0x9000, scoped, tag = 'internal scratch']
  %s0 = inlined_call_operand.vmem [shape: bf16[2,12,64], index: 0, kind: input, shape index: {}]
  %s1 = inlined_call_operand.vmem [shape: f32[32,12], index: 1, kind: input, shape index: {}]
  %s2 = inlined_call_operand.vmem [shape: f32[32,1], index: 2, kind: input, shape index: {}]
  %s3 = inlined_call_operand.vmem [shape: f32[8,32], index: 3, kind: input, shape index: {}]
  %s4 = inlined_call_operand.vmem [shape: f32[8,32], index: 4, kind: input, shape index: {}]
  %s5 = inlined_call_operand.vmem [shape: f32[8,1], index: 5, kind: input, shape index: {}]
  %s6 = inlined_call_operand.hbm [shape: f32[2,8,64], index: 6, kind: output, shape index: {}]
  %s7 = sld [smem:[#allocation0]]
  $region34: #{tpu_custom_call.1} parent=0
    _
  %s9 = ssub.s32 1, %s7
  %s10 = scalar_select 0, %s9, %s7
  $region1: #{tpu_custom_call.1} parent=0
    #allocation2 [shape = 'u8[8192]{0}', space=vmem, size = 0x2000, scoped, tag = 'output window, operand 0, single buffered']
    #allocation3 [shape = 's32[1]{0}', space=sflag, size = 0x4, scoped, tag = 'scoped memory for tpu_custom_call.1']
    %11 = vsyncpa [#allocation3], 0
    // Predicated region
    $region2: #{tpu_custom_call.1} parent=1 // pred_check
      _
    $region3: #{tpu_custom_call.1} parent=1 // pred_check_branch
      %13 = sbr.rel (0) target = $region5
    $region4: #{tpu_custom_call.1} parent=1 // pred_region
      _
    $region5: #{tpu_custom_call.1} parent=1 // pred_fallthru
      _
    // Predicated region
    $region6: #{tpu_custom_call.1} parent=1 // pred_check
      _
    $region7: #{tpu_custom_call.1} parent=1 // pred_check_branch
      %15 = sbr.rel (0) target = $region9
    $region8: #{tpu_custom_call.1} parent=1 // pred_region
      _
    $region9: #{tpu_custom_call.1} parent=1 // pred_fallthru
      _
    // Predicated region
    $region10: #{tpu_custom_call.1} parent=1 // pred_check
      _
    $region11: #{tpu_custom_call.1} parent=1 // pred_check_branch
      %17 = sbr.rel (0) target = $region13
    $region12: #{tpu_custom_call.1} parent=1 // pred_region
      _
    $region13: #{tpu_custom_call.1} parent=1 // pred_fallthru
      _
    // Predicated region
    $region14: #{tpu_custom_call.1} parent=1 // pred_check
      _
    $region15: #{tpu_custom_call.1} parent=1 // pred_check_branch
      %19 = sbr.rel (0) target = $region17
    $region16: #{tpu_custom_call.1} parent=1 // pred_region
      _
    $region17: #{tpu_custom_call.1} parent=1 // pred_fallthru
      _
    // Predicated region
    $region18: #{tpu_custom_call.1} parent=1 // pred_check
      _
    $region19: #{tpu_custom_call.1} parent=1 // pred_check_branch
      %21 = sbr.rel (0) target = $region21
    $region20: #{tpu_custom_call.1} parent=1 // pred_region
      _
    $region21: #{tpu_custom_call.1} parent=1 // pred_fallthru
      _
    // Predicated region
    $region22: #{tpu_custom_call.1} parent=1 // pred_check
      _
    $region23: #{tpu_custom_call.1} parent=1 // pred_check_branch
      %23 = sbr.rel (0) target = $region25
    $region24: #{tpu_custom_call.1} parent=1 // pred_region
      _
    $region25: #{tpu_custom_call.1} parent=1 // pred_fallthru
      _
    %v24 = vld [vmem:[%s0] sm:$0xf]
    %v25 = vld [vmem:[%s0 + $0x4] sm:$0x3]
    %v26 = vld [vmem:[%s0 + $0x8] sm:$0xf]
    %v27 = vld [vmem:[%s0 + $0xc] sm:$0x3]
    %v28 = vunpack.c.l.bf16 %v24
    %v29 = vunpack.c.l.bf16 %v25
    %v30 = vunpack.c.l.bf16 %v26
    %v31 = vunpack.c.l.bf16 %v27
    %v32 = vld [vmem:[%s1] sm:$0xff]
    %v33 = vld [vmem:[%s1 + $0x8] sm:$0xff]
    %v34 = vld [vmem:[%s1 + $0x10] sm:$0xff]
    %v35 = vld [vmem:[%s1 + $0x18] sm:$0xff]
    %v36 = vld [vmem:[%s2] sm:$0xff]
    %v37 = vld [vmem:[%s2 + $0x8] sm:$0xff]
    %v38 = vld [vmem:[%s2 + $0x10] sm:$0xff]
    %v39 = vld [vmem:[%s2 + $0x18] sm:$0xff]
    %41 = vset.pattern.permute.xlu0 0
    %42 = vperm.xlu0 %41, %v36
    %v43 = vpop.permute.xlu0 %42
    %46 = vset.pattern.permute.xlu0 0
    %47 = vperm.xlu0 %46, %v37
    %v48 = vpop.permute.xlu0 %47
    %51 = vset.pattern.permute.xlu0 0
    %52 = vperm.xlu0 %51, %v38
    %v53 = vpop.permute.xlu0 %52
    %56 = vset.pattern.permute.xlu0 0
    %57 = vperm.xlu0 %56, %v39
    %v58 = vpop.permute.xlu0 %57
    %vm60 = vcmask 97280
    %v62 = vsel %vm60, %v32, 0
    %v65 = vsel %vm60, %v33, 0
    %v68 = vsel %vm60, %v34, 0
    %v71 = vsel %vm60, %v35, 0
    %vm73 = vcmask 1043456
    %v75 = vsel %vm73, %v29, 0
    %77 = vmatpush.msra.mxu0 0.0
    %78 = vmatpush.msra.mxu0 0.0
    %79 = vmatpush.msra.mxu0 0.0
    %80 = vmatpush.msra.mxu0 0.0
    %81 = vmatpush.msra.mxu0 0.0
    %82 = vmatpush.msra.mxu0 0.0
    %83 = vmatpush.msra.mxu0 0.0
    %84 = vmatpush.msra.mxu0 0.0
    %85 = vmatpush.msra.mxu0 0.0
    %86 = vmatpush.msra.mxu0 0.0
    %87 = vmatpush.msra.mxu0 0.0
    %88 = vmatpush.msra.mxu0 0.0
    %89 = vmatpush.msra.mxu0 0.0
    %90 = vmatpush.msra.mxu0 0.0
    %91 = vmatpush.msra.mxu0 %v75
    %92 = vmatpush.msra.mxu0 %v28
    %93 = vmatmul.f32.gmra.mxu0 %v62
    %v94 = vpop.f32.mrf.mxu0
    %v95 = vadd.f32 %v43, %v94
    %96 = vmatmul.f32.gmra.mxu0 %v65
    %v97 = vpop.f32.mrf.mxu0
    %v98 = vadd.f32 %v48, %v97
    %99 = vmatmul.f32.gmra.mxu0 %v68
    %v100 = vpop.f32.mrf.mxu0
    %v101 = vadd.f32 %v53, %v100
    %102 = vmatmul.f32.gmra.mxu0 %v71
    %v103 = vpop.f32.mrf.mxu0
    %v104 = vadd.f32 %v58, %v103
    %105 = vdwg.mxu0
    %v107 = vsel %vm73, %v31, 0
    %109 = vmatpush.msra.mxu0 0.0
    %110 = vmatpush.msra.mxu0 0.0
    %111 = vmatpush.msra.mxu0 0.0
    %112 = vmatpush.msra.mxu0 0.0
    %113 = vmatpush.msra.mxu0 0.0
    %114 = vmatpush.msra.mxu0 0.0
    %115 = vmatpush.msra.mxu0 0.0
    %116 = vmatpush.msra.mxu0 0.0
    %117 = vmatpush.msra.mxu0 0.0
    %118 = vmatpush.msra.mxu0 0.0
    %119 = vmatpush.msra.mxu0 0.0
    %120 = vmatpush.msra.mxu0 0.0
    %121 = vmatpush.msra.mxu0 0.0
    %122 = vmatpush.msra.mxu0 0.0
    %123 = vmatpush.msra.mxu0 %v107
    %124 = vmatpush.msra.mxu0 %v30
    %125 = vmatmul.f32.gmra.mxu0 %v62
    %v126 = vpop.f32.mrf.mxu0
    %v127 = vadd.f32 %v43, %v126
    %128 = vmatmul.f32.gmra.mxu0 %v65
    %v129 = vpop.f32.mrf.mxu0
    %v130 = vadd.f32 %v48, %v129
    %131 = vmatmul.f32.gmra.mxu0 %v68
    %v132 = vpop.f32.mrf.mxu0
    %v133 = vadd.f32 %v53, %v132
    %134 = vmatmul.f32.gmra.mxu0 %v71
    %v135 = vpop.f32.mrf.mxu0
    %v136 = vadd.f32 %v58, %v135
    %137 = vdwg.mxu0
    %v138 = vld [vmem:[%s3] sm:$0xff]
    %vm139 = vcmask 261120
    %v141 = vsel %vm139, %v138, 0
    %143 = vmatpush.msra.mxu0 0.0
    %144 = vmatpush.msra.mxu0 0.0
    %145 = vmatpush.msra.mxu0 0.0
    %146 = vmatpush.msra.mxu0 0.0
    %147 = vmatpush.msra.mxu0 0.0
    %148 = vmatpush.msra.mxu0 0.0
    %149 = vmatpush.msra.mxu0 0.0
    %150 = vmatpush.msra.mxu0 0.0
    %151 = vmatpush.msra.mxu0 0.0
    %152 = vmatpush.msra.mxu0 0.0
    %153 = vmatpush.msra.mxu0 0.0
    %154 = vmatpush.msra.mxu0 0.0
    %155 = vmatpush.msra.mxu0 %v104
    %156 = vmatpush.msra.mxu0 %v101
    %157 = vmatpush.msra.mxu0 %v98
    %158 = vmatpush.msra.mxu0 %v95
    %159 = vmatmul.f32.gmra.mxu0 %v141
    %v160 = vpop.f32.mrf.mxu0
    %v161 = vadd.f32 0.0, %v160
    %162 = vdwg.mxu0
    %163 = vmatpush.msra.mxu0 0.0
    %164 = vmatpush.msra.mxu0 0.0
    %165 = vmatpush.msra.mxu0 0.0
    %166 = vmatpush.msra.mxu0 0.0
    %167 = vmatpush.msra.mxu0 0.0
    %168 = vmatpush.msra.mxu0 0.0
    %169 = vmatpush.msra.mxu0 0.0
    %170 = vmatpush.msra.mxu0 0.0
    %171 = vmatpush.msra.mxu0 0.0
    %172 = vmatpush.msra.mxu0 0.0
    %173 = vmatpush.msra.mxu0 0.0
    %174 = vmatpush.msra.mxu0 0.0
    %175 = vmatpush.msra.mxu0 %v136
    %176 = vmatpush.msra.mxu0 %v133
    %177 = vmatpush.msra.mxu0 %v130
    %178 = vmatpush.msra.mxu0 %v127
    %179 = vmatmul.f32.gmra.mxu0 %v141
    %v180 = vpop.f32.mrf.mxu0
    %v181 = vadd.f32 0.0, %v180
    %182 = vdwg.mxu0
    %vm183 = vcmask 523264
    %v184 = vsel %vm183, %v161, -inf
    %v185 = vrot.slane %v184, 4
    %v186 = vmax.f32 %v184, %v185
    %v187 = vrot.slane %v186, 2
    %v188 = vmax.f32 %v186, %v187
    %v189 = vrot.slane %v188, 1
    %v190 = vmax.f32 %v188, %v189
    %v191 = vsel %vm183, %v181, -inf
    %v192 = vrot.slane %v191, 4
    %v193 = vmax.f32 %v191, %v192
    %v194 = vrot.slane %v193, 2
    %v195 = vmax.f32 %v193, %v194
    %v196 = vrot.slane %v195, 1
    %v197 = vmax.f32 %v195, %v196
    %v198 = vsub.f32 %v161, %v190
    %v199 = vsub.f32 %v181, %v197
    %v200 = vmul.f32 %v198, 1.442695
    %v201 = vpow.pop %v200
    %v202 = vmul.f32 %v199, 1.442695
    %v203 = vpow.pop %v202
    %v204 = vsel %vm183, %v201, 0.0
    %v205 = vrot.slane %v204, 4
    %v206 = vadd.f32 %v204, %v205
    %v207 = vrot.slane %v206, 2
    %v208 = vadd.f32 %v206, %v207
    %v209 = vrot.slane %v208, 1
    %v210 = vadd.f32 %v208, %v209
    %v211 = vsel %vm183, %v203, 0.0
    %v212 = vrot.slane %v211, 4
    %v213 = vadd.f32 %v211, %v212
    %v214 = vrot.slane %v213, 2
    %v215 = vadd.f32 %v213, %v214
    %v216 = vrot.slane %v215, 1
    %v217 = vadd.f32 %v215, %v216
    %v218 = vrcp.pop %v210
    %v219 = vmul.f32 %v210, %v218
    %v220 = vsub.f32 1.0, %v219
    %v221 = vmul.f32 %v218, %v220
    %v222 = vadd.f32 %v218, %v221
    %vm223 = vweird.f32 %v210
    %vm224 = vweird.f32 %v218
    %vm225 = vmor %vm223, %vm224
    %v226 = vsel %vm225, %v218, %v222
    %v227 = vand.u32 2147483647, %v210
    %vm228 = vcmp.eq.f32.partialorder %v227, 8.507059e+37
    %v229 = vand.u32 %v210, 2147483648
    %v230 = vor.u32 1.1754944e-38, %v229
    %v231 = vsel %vm228, %v230, %v226
    %v232 = vmul.f32 %v201, %v231
    %v233 = vrcp.pop %v217
    %v234 = vmul.f32 %v217, %v233
    %v235 = vsub.f32 1.0, %v234
    %v236 = vmul.f32 %v233, %v235
    %v237 = vadd.f32 %v233, %v236
    %vm238 = vweird.f32 %v217
    %vm239 = vweird.f32 %v233
    %vm240 = vmor %vm238, %vm239
    %v241 = vsel %vm240, %v233, %v237
    %v242 = vand.u32 2147483647, %v217
    %vm243 = vcmp.eq.f32.partialorder %v242, 8.507059e+37
    %v244 = vand.u32 %v217, 2147483648
    %v245 = vor.u32 1.1754944e-38, %v244
    %v246 = vsel %vm243, %v245, %v241
    %v247 = vmul.f32 %v203, %v246
    %v249 = vsel %vm183, %v232, 0
    %v252 = vsel %vm183, %v95, 0
    %v255 = vsel %vm183, %v98, 0
    %v258 = vsel %vm183, %v101, 0
    %v261 = vsel %vm183, %v104, 0
    %263 = vmatpush.xpose.msra.mxu0 0.0
    %264 = vmatpush.xpose.msra.mxu0 0.0
    %265 = vmatpush.xpose.msra.mxu0 0.0
    %266 = vmatpush.xpose.msra.mxu0 0.0
    %267 = vmatpush.xpose.msra.mxu0 0.0
    %268 = vmatpush.xpose.msra.mxu0 0.0
    %269 = vmatpush.xpose.msra.mxu0 0.0
    %270 = vmatpush.xpose.msra.mxu0 0.0
    %271 = vmatpush.xpose.msra.mxu0 0.0
    %272 = vmatpush.xpose.msra.mxu0 0.0
    %273 = vmatpush.xpose.msra.mxu0 0.0
    %274 = vmatpush.xpose.msra.mxu0 0.0
    %275 = vmatpush.xpose.msra.mxu0 %v261
    %276 = vmatpush.xpose.msra.mxu0 %v258
    %277 = vmatpush.xpose.msra.mxu0 %v255
    %278 = vmatpush.xpose.msra.mxu0 %v252
    %279 = vmatmul.f32.gmra.mxu0 %v249
    %v280 = vpop.f32.mrf.mxu0
    %v281 = vadd.f32 0.0, %v280
    %282 = vdwg.mxu0
    %v284 = vsel %vm183, %v247, 0
    %v287 = vsel %vm183, %v127, 0
    %v290 = vsel %vm183, %v130, 0
    %v293 = vsel %vm183, %v133, 0
    %v296 = vsel %vm183, %v136, 0
    %298 = vmatpush.xpose.msra.mxu0 0.0
    %299 = vmatpush.xpose.msra.mxu0 0.0
    %300 = vmatpush.xpose.msra.mxu0 0.0
    %301 = vmatpush.xpose.msra.mxu0 0.0
    %302 = vmatpush.xpose.msra.mxu0 0.0
    %303 = vmatpush.xpose.msra.mxu0 0.0
    %304 = vmatpush.xpose.msra.mxu0 0.0
    %305 = vmatpush.xpose.msra.mxu0 0.0
    %306 = vmatpush.xpose.msra.mxu0 0.0
    %307 = vmatpush.xpose.msra.mxu0 0.0
    %308 = vmatpush.xpose.msra.mxu0 0.0
    %309 = vmatpush.xpose.msra.mxu0 0.0
    %310 = vmatpush.xpose.msra.mxu0 %v296
    %311 = vmatpush.xpose.msra.mxu0 %v293
    %312 = vmatpush.xpose.msra.mxu0 %v290
    %313 = vmatpush.xpose.msra.mxu0 %v287
    %314 = vmatmul.f32.gmra.mxu0 %v284
    %v315 = vpop.f32.mrf.mxu0
    %v316 = vadd.f32 0.0, %v315
    %317 = vdwg.mxu0
    %v318 = vsel %vm183, %v232, 0.0
    %319 = vadd.xlane.f32.xlu0 %v318
    %v320 = vpop.xlane.xlu0 %319
    %v321 = vsel %vm183, %v247, 0.0
    %322 = vadd.xlane.f32.xlu0 %v321
    %v323 = vpop.xlane.xlu0 %322
    %v324 = vadd.f32 %v320, 1e-06
    %v325 = vadd.f32 %v323, 1e-06
    %v326 = vrcp.pop %v324
    %v327 = vrcp.pop %v325
    %v328 = vmul.f32 %v281, %v326
    %v329 = vmul.f32 %v316, %v327
    %v330 = vmul.f32 %v328, %v328
    %v331 = vmul.f32 %v329, %v329
    %v332 = vsel %vm139, %v330, 0.0
    %333 = vadd.xlane.f32.xlu0 %v332
    %v334 = vpop.xlane.xlu0 %333
    %v335 = vsel %vm139, %v331, 0.0
    %336 = vadd.xlane.f32.xlu0 %v335
    %v337 = vpop.xlane.xlu0 %336
    %v338 = vadd.f32 %v334, 1e-06
    %v339 = vadd.f32 %v337, 1e-06
    %v340 = vrsqrt.pop %v338
    %v341 = vmul.f32 %v340, %v338
    %v342 = vmul.f32 %v341, %v340
    %v343 = vmul.f32 0.5, %v342
    %v344 = vsub.f32 1.5, %v343
    %v345 = vmul.f32 %v340, %v344
    %vm346 = vweird.f32 %v338
    %vm347 = vweird.f32 %v340
    %vm348 = vmor %vm346, %vm347
    %v349 = vsel %vm348, %v340, %v345
    %v350 = vrsqrt.pop %v339
    %v351 = vmul.f32 %v350, %v339
    %v352 = vmul.f32 %v351, %v350
    %v353 = vmul.f32 0.5, %v352
    %v354 = vsub.f32 1.5, %v353
    %v355 = vmul.f32 %v350, %v354
    %vm356 = vweird.f32 %v339
    %vm357 = vweird.f32 %v350
    %vm358 = vmor %vm356, %vm357
    %v359 = vsel %vm358, %v350, %v355
    %v360 = vmul.f32 %v328, %v349
    %v361 = vmul.f32 %v329, %v359
    %v363 = vsel %vm139, %v360, 0
    %365 = vmatpush.msra.mxu0 0.0
    %366 = vmatpush.msra.mxu0 0.0
    %367 = vmatpush.msra.mxu0 0.0
    %368 = vmatpush.msra.mxu0 0.0
    %369 = vmatpush.msra.mxu0 0.0
    %370 = vmatpush.msra.mxu0 0.0
    %371 = vmatpush.msra.mxu0 0.0
    %372 = vmatpush.msra.mxu0 0.0
    %373 = vmatpush.msra.mxu0 0.0
    %374 = vmatpush.msra.mxu0 0.0
    %375 = vmatpush.msra.mxu0 0.0
    %376 = vmatpush.msra.mxu0 0.0
    %377 = vmatpush.msra.mxu0 %v104
    %378 = vmatpush.msra.mxu0 %v101
    %379 = vmatpush.msra.mxu0 %v98
    %380 = vmatpush.msra.mxu0 %v95
    %381 = vmatmul.f32.gmra.mxu0 %v363
    %v382 = vpop.f32.mrf.mxu0
    %v383 = vadd.f32 0.0, %v382
    %384 = vdwg.mxu0
    %v386 = vsel %vm139, %v361, 0
    %388 = vmatpush.msra.mxu0 0.0
    %389 = vmatpush.msra.mxu0 0.0
    %390 = vmatpush.msra.mxu0 0.0
    %391 = vmatpush.msra.mxu0 0.0
    %392 = vmatpush.msra.mxu0 0.0
    %393 = vmatpush.msra.mxu0 0.0
    %394 = vmatpush.msra.mxu0 0.0
    %395 = vmatpush.msra.mxu0 0.0
    %396 = vmatpush.msra.mxu0 0.0
    %397 = vmatpush.msra.mxu0 0.0
    %398 = vmatpush.msra.mxu0 0.0
    %399 = vmatpush.msra.mxu0 0.0
    %400 = vmatpush.msra.mxu0 %v136
    %401 = vmatpush.msra.mxu0 %v133
    %402 = vmatpush.msra.mxu0 %v130
    %403 = vmatpush.msra.mxu0 %v127
    %404 = vmatmul.f32.gmra.mxu0 %v386
    %v405 = vpop.f32.mrf.mxu0
    %v406 = vadd.f32 0.0, %v405
    %407 = vdwg.mxu0
    %v408 = vsel %vm183, %v383, -inf
    %v409 = vrot.slane %v408, 4
    %v410 = vmax.f32 %v408, %v409
    %v411 = vrot.slane %v410, 2
    %v412 = vmax.f32 %v410, %v411
    %v413 = vrot.slane %v412, 1
    %v414 = vmax.f32 %v412, %v413
    %v415 = vsel %vm183, %v406, -inf
    %v416 = vrot.slane %v415, 4
    %v417 = vmax.f32 %v415, %v416
    %v418 = vrot.slane %v417, 2
    %v419 = vmax.f32 %v417, %v418
    %v420 = vrot.slane %v419, 1
    %v421 = vmax.f32 %v419, %v420
    %v422 = vsub.f32 %v383, %v414
    %v423 = vsub.f32 %v406, %v421
    %v424 = vmul.f32 %v422, 1.442695
    %v425 = vpow.pop %v424
    %v426 = vmul.f32 %v423, 1.442695
    %v427 = vpow.pop %v426
    %v428 = vsel %vm183, %v425, 0.0
    %v429 = vrot.slane %v428, 4
    %v430 = vadd.f32 %v428, %v429
    %v431 = vrot.slane %v430, 2
    %v432 = vadd.f32 %v430, %v431
    %v433 = vrot.slane %v432, 1
    %v434 = vadd.f32 %v432, %v433
    %v435 = vsel %vm183, %v427, 0.0
    %v436 = vrot.slane %v435, 4
    %v437 = vadd.f32 %v435, %v436
    %v438 = vrot.slane %v437, 2
    %v439 = vadd.f32 %v437, %v438
    %v440 = vrot.slane %v439, 1
    %v441 = vadd.f32 %v439, %v440
    %v442 = vrcp.pop %v434
    %v443 = vmul.f32 %v434, %v442
    %v444 = vsub.f32 1.0, %v443
    %v445 = vmul.f32 %v442, %v444
    %v446 = vadd.f32 %v442, %v445
    %vm447 = vweird.f32 %v434
    %vm448 = vweird.f32 %v442
    %vm449 = vmor %vm447, %vm448
    %v450 = vsel %vm449, %v442, %v446
    %v451 = vand.u32 2147483647, %v434
    %vm452 = vcmp.eq.f32.partialorder %v451, 8.507059e+37
    %v453 = vand.u32 %v434, 2147483648
    %v454 = vor.u32 1.1754944e-38, %v453
    %v455 = vsel %vm452, %v454, %v450
    %v456 = vmul.f32 %v425, %v455
    %v457 = vrcp.pop %v441
    %v458 = vmul.f32 %v441, %v457
    %v459 = vsub.f32 1.0, %v458
    %v460 = vmul.f32 %v457, %v459
    %v461 = vadd.f32 %v457, %v460
    %vm462 = vweird.f32 %v441
    %vm463 = vweird.f32 %v457
    %vm464 = vmor %vm462, %vm463
    %v465 = vsel %vm464, %v457, %v461
    %v466 = vand.u32 2147483647, %v441
    %vm467 = vcmp.eq.f32.partialorder %v466, 8.507059e+37
    %v468 = vand.u32 %v441, 2147483648
    %v469 = vor.u32 1.1754944e-38, %v468
    %v470 = vsel %vm467, %v469, %v465
    %v471 = vmul.f32 %v427, %v470
    %v473 = vsel %vm183, %v456, 0
    %475 = vmatpush.xpose.msra.mxu0 0.0
    %476 = vmatpush.xpose.msra.mxu0 0.0
    %477 = vmatpush.xpose.msra.mxu0 0.0
    %478 = vmatpush.xpose.msra.mxu0 0.0
    %479 = vmatpush.xpose.msra.mxu0 0.0
    %480 = vmatpush.xpose.msra.mxu0 0.0
    %481 = vmatpush.xpose.msra.mxu0 0.0
    %482 = vmatpush.xpose.msra.mxu0 0.0
    %483 = vmatpush.xpose.msra.mxu0 0.0
    %484 = vmatpush.xpose.msra.mxu0 0.0
    %485 = vmatpush.xpose.msra.mxu0 0.0
    %486 = vmatpush.xpose.msra.mxu0 0.0
    %487 = vmatpush.xpose.msra.mxu0 %v261
    %488 = vmatpush.xpose.msra.mxu0 %v258
    %489 = vmatpush.xpose.msra.mxu0 %v255
    %490 = vmatpush.xpose.msra.mxu0 %v252
    %491 = vmatmul.f32.gmra.mxu0 %v473
    %v492 = vpop.f32.mrf.mxu0
    %v493 = vadd.f32 0.0, %v492
    %494 = vdwg.mxu0
    %v496 = vsel %vm183, %v471, 0
    %498 = vmatpush.xpose.msra.mxu0 0.0
    %499 = vmatpush.xpose.msra.mxu0 0.0
    %500 = vmatpush.xpose.msra.mxu0 0.0
    %501 = vmatpush.xpose.msra.mxu0 0.0
    %502 = vmatpush.xpose.msra.mxu0 0.0
    %503 = vmatpush.xpose.msra.mxu0 0.0
    %504 = vmatpush.xpose.msra.mxu0 0.0
    %505 = vmatpush.xpose.msra.mxu0 0.0
    %506 = vmatpush.xpose.msra.mxu0 0.0
    %507 = vmatpush.xpose.msra.mxu0 0.0
    %508 = vmatpush.xpose.msra.mxu0 0.0
    %509 = vmatpush.xpose.msra.mxu0 0.0
    %510 = vmatpush.xpose.msra.mxu0 %v296
    %511 = vmatpush.xpose.msra.mxu0 %v293
    %512 = vmatpush.xpose.msra.mxu0 %v290
    %513 = vmatpush.xpose.msra.mxu0 %v287
    %514 = vmatmul.f32.gmra.mxu0 %v496
    %v515 = vpop.f32.mrf.mxu0
    %v516 = vadd.f32 0.0, %v515
    %517 = vdwg.mxu0
    %v518 = vsel %vm183, %v456, 0.0
    %519 = vadd.xlane.f32.xlu0 %v518
    %v520 = vpop.xlane.xlu0 %519
    %v521 = vsel %vm183, %v471, 0.0
    %522 = vadd.xlane.f32.xlu0 %v521
    %v523 = vpop.xlane.xlu0 %522
    %v524 = vadd.f32 %v520, 1e-06
    %v525 = vadd.f32 %v523, 1e-06
    %v526 = vrcp.pop %v524
    %v527 = vrcp.pop %v525
    %v528 = vmul.f32 %v493, %v526
    %v529 = vmul.f32 %v516, %v527
    %v530 = vmul.f32 %v528, %v528
    %v531 = vmul.f32 %v529, %v529
    %v532 = vsel %vm139, %v530, 0.0
    %533 = vadd.xlane.f32.xlu0 %v532
    %v534 = vpop.xlane.xlu0 %533
    %v535 = vsel %vm139, %v531, 0.0
    %536 = vadd.xlane.f32.xlu0 %v535
    %v537 = vpop.xlane.xlu0 %536
    %v538 = vadd.f32 %v534, 1e-06
    %v539 = vadd.f32 %v537, 1e-06
    %v540 = vrsqrt.pop %v538
    %v541 = vmul.f32 %v540, %v538
    %v542 = vmul.f32 %v541, %v540
    %v543 = vmul.f32 0.5, %v542
    %v544 = vsub.f32 1.5, %v543
    %v545 = vmul.f32 %v540, %v544
    %vm546 = vweird.f32 %v538
    %vm547 = vweird.f32 %v540
    %vm548 = vmor %vm546, %vm547
    %v549 = vsel %vm548, %v540, %v545
    %v550 = vrsqrt.pop %v539
    %v551 = vmul.f32 %v550, %v539
    %v552 = vmul.f32 %v551, %v550
    %v553 = vmul.f32 0.5, %v552
    %v554 = vsub.f32 1.5, %v553
    %v555 = vmul.f32 %v550, %v554
    %vm556 = vweird.f32 %v539
    %vm557 = vweird.f32 %v550
    %vm558 = vmor %vm556, %vm557
    %v559 = vsel %vm558, %v550, %v555
    %v560 = vmul.f32 %v528, %v549
    %v561 = vmul.f32 %v529, %v559
    %v563 = vsel %vm139, %v560, 0
    %565 = vmatpush.msra.mxu0 0.0
    %566 = vmatpush.msra.mxu0 0.0
    %567 = vmatpush.msra.mxu0 0.0
    %568 = vmatpush.msra.mxu0 0.0
    %569 = vmatpush.msra.mxu0 0.0
    %570 = vmatpush.msra.mxu0 0.0
    %571 = vmatpush.msra.mxu0 0.0
    %572 = vmatpush.msra.mxu0 0.0
    %573 = vmatpush.msra.mxu0 0.0
    %574 = vmatpush.msra.mxu0 0.0
    %575 = vmatpush.msra.mxu0 0.0
    %576 = vmatpush.msra.mxu0 0.0
    %577 = vmatpush.msra.mxu0 %v104
    %578 = vmatpush.msra.mxu0 %v101
    %579 = vmatpush.msra.mxu0 %v98
    %580 = vmatpush.msra.mxu0 %v95
    %581 = vmatmul.f32.gmra.mxu0 %v563
    %v582 = vpop.f32.mrf.mxu0
    %v583 = vadd.f32 0.0, %v582
    %584 = vdwg.mxu0
    %v586 = vsel %vm139, %v561, 0
    %588 = vmatpush.msra.mxu0 0.0
    %589 = vmatpush.msra.mxu0 0.0
    %590 = vmatpush.msra.mxu0 0.0
    %591 = vmatpush.msra.mxu0 0.0
    %592 = vmatpush.msra.mxu0 0.0
    %593 = vmatpush.msra.mxu0 0.0
    %594 = vmatpush.msra.mxu0 0.0
    %595 = vmatpush.msra.mxu0 0.0
    %596 = vmatpush.msra.mxu0 0.0
    %597 = vmatpush.msra.mxu0 0.0
    %598 = vmatpush.msra.mxu0 0.0
    %599 = vmatpush.msra.mxu0 0.0
    %600 = vmatpush.msra.mxu0 %v136
    %601 = vmatpush.msra.mxu0 %v133
    %602 = vmatpush.msra.mxu0 %v130
    %603 = vmatpush.msra.mxu0 %v127
    %604 = vmatmul.f32.gmra.mxu0 %v586
    %v605 = vpop.f32.mrf.mxu0
    %v606 = vadd.f32 0.0, %v605
    %607 = vdwg.mxu0
    %v608 = vsel %vm183, %v583, -inf
    %v609 = vrot.slane %v608, 4
    %v610 = vmax.f32 %v608, %v609
    %v611 = vrot.slane %v610, 2
    %v612 = vmax.f32 %v610, %v611
    %v613 = vrot.slane %v612, 1
    %v614 = vmax.f32 %v612, %v613
    %v615 = vsel %vm183, %v606, -inf
    %v616 = vrot.slane %v615, 4
    %v617 = vmax.f32 %v615, %v616
    %v618 = vrot.slane %v617, 2
    %v619 = vmax.f32 %v617, %v618
    %v620 = vrot.slane %v619, 1
    %v621 = vmax.f32 %v619, %v620
    %v622 = vsub.f32 %v583, %v614
    %v623 = vsub.f32 %v606, %v621
    %v624 = vmul.f32 %v622, 1.442695
    %v625 = vpow.pop %v624
    %v626 = vmul.f32 %v623, 1.442695
    %v627 = vpow.pop %v626
    %v628 = vsel %vm183, %v625, 0.0
    %v629 = vrot.slane %v628, 4
    %v630 = vadd.f32 %v628, %v629
    %v631 = vrot.slane %v630, 2
    %v632 = vadd.f32 %v630, %v631
    %v633 = vrot.slane %v632, 1
    %v634 = vadd.f32 %v632, %v633
    %v635 = vsel %vm183, %v627, 0.0
    %v636 = vrot.slane %v635, 4
    %v637 = vadd.f32 %v635, %v636
    %v638 = vrot.slane %v637, 2
    %v639 = vadd.f32 %v637, %v638
    %v640 = vrot.slane %v639, 1
    %v641 = vadd.f32 %v639, %v640
    %v642 = vrcp.pop %v634
    %v643 = vmul.f32 %v634, %v642
    %v644 = vsub.f32 1.0, %v643
    %v645 = vmul.f32 %v642, %v644
    %v646 = vadd.f32 %v642, %v645
    %vm647 = vweird.f32 %v634
    %vm648 = vweird.f32 %v642
    %vm649 = vmor %vm647, %vm648
    %v650 = vsel %vm649, %v642, %v646
    %v651 = vand.u32 2147483647, %v634
    %vm652 = vcmp.eq.f32.partialorder %v651, 8.507059e+37
    %v653 = vand.u32 %v634, 2147483648
    %v654 = vor.u32 1.1754944e-38, %v653
    %v655 = vsel %vm652, %v654, %v650
    %v656 = vmul.f32 %v625, %v655
    %v657 = vrcp.pop %v641
    %v658 = vmul.f32 %v641, %v657
    %v659 = vsub.f32 1.0, %v658
    %v660 = vmul.f32 %v657, %v659
    %v661 = vadd.f32 %v657, %v660
    %vm662 = vweird.f32 %v641
    %vm663 = vweird.f32 %v657
    %vm664 = vmor %vm662, %vm663
    %v665 = vsel %vm664, %v657, %v661
    %v666 = vand.u32 2147483647, %v641
    %vm667 = vcmp.eq.f32.partialorder %v666, 8.507059e+37
    %v668 = vand.u32 %v641, 2147483648
    %v669 = vor.u32 1.1754944e-38, %v668
    %v670 = vsel %vm667, %v669, %v665
    %v671 = vmul.f32 %v627, %v670
    %v673 = vsel %vm183, %v656, 0
    %675 = vmatpush.xpose.msra.mxu0 0.0
    %676 = vmatpush.xpose.msra.mxu0 0.0
    %677 = vmatpush.xpose.msra.mxu0 0.0
    %678 = vmatpush.xpose.msra.mxu0 0.0
    %679 = vmatpush.xpose.msra.mxu0 0.0
    %680 = vmatpush.xpose.msra.mxu0 0.0
    %681 = vmatpush.xpose.msra.mxu0 0.0
    %682 = vmatpush.xpose.msra.mxu0 0.0
    %683 = vmatpush.xpose.msra.mxu0 0.0
    %684 = vmatpush.xpose.msra.mxu0 0.0
    %685 = vmatpush.xpose.msra.mxu0 0.0
    %686 = vmatpush.xpose.msra.mxu0 0.0
    %687 = vmatpush.xpose.msra.mxu0 %v261
    %688 = vmatpush.xpose.msra.mxu0 %v258
    %689 = vmatpush.xpose.msra.mxu0 %v255
    %690 = vmatpush.xpose.msra.mxu0 %v252
    %691 = vmatmul.f32.gmra.mxu0 %v673
    %v692 = vpop.f32.mrf.mxu0
    %v693 = vadd.f32 0.0, %v692
    %694 = vdwg.mxu0
    %v696 = vsel %vm183, %v671, 0
    %698 = vmatpush.xpose.msra.mxu0 0.0
    %699 = vmatpush.xpose.msra.mxu0 0.0
    %700 = vmatpush.xpose.msra.mxu0 0.0
    %701 = vmatpush.xpose.msra.mxu0 0.0
    %702 = vmatpush.xpose.msra.mxu0 0.0
    %703 = vmatpush.xpose.msra.mxu0 0.0
    %704 = vmatpush.xpose.msra.mxu0 0.0
    %705 = vmatpush.xpose.msra.mxu0 0.0
    %706 = vmatpush.xpose.msra.mxu0 0.0
    %707 = vmatpush.xpose.msra.mxu0 0.0
    %708 = vmatpush.xpose.msra.mxu0 0.0
    %709 = vmatpush.xpose.msra.mxu0 0.0
    %710 = vmatpush.xpose.msra.mxu0 %v296
    %711 = vmatpush.xpose.msra.mxu0 %v293
    %712 = vmatpush.xpose.msra.mxu0 %v290
    %713 = vmatpush.xpose.msra.mxu0 %v287
    %714 = vmatmul.f32.gmra.mxu0 %v696
    %v715 = vpop.f32.mrf.mxu0
    %v716 = vadd.f32 0.0, %v715
    %717 = vdwg.mxu0
    %v718 = vsel %vm183, %v656, 0.0
    %719 = vadd.xlane.f32.xlu0 %v718
    %v720 = vpop.xlane.xlu0 %719
    %v721 = vsel %vm183, %v671, 0.0
    %722 = vadd.xlane.f32.xlu0 %v721
    %v723 = vpop.xlane.xlu0 %722
    %v724 = vadd.f32 %v720, 1e-06
    %v725 = vadd.f32 %v723, 1e-06
    %v726 = vrcp.pop %v724
    %v727 = vrcp.pop %v725
    %v728 = vmul.f32 %v693, %v726
    %v729 = vmul.f32 %v716, %v727
    %v730 = vmul.f32 %v728, %v728
    %v731 = vmul.f32 %v729, %v729
    %v732 = vsel %vm139, %v730, 0.0
    %733 = vadd.xlane.f32.xlu0 %v732
    %v734 = vpop.xlane.xlu0 %733
    %v735 = vsel %vm139, %v731, 0.0
    %736 = vadd.xlane.f32.xlu0 %v735
    %v737 = vpop.xlane.xlu0 %736
    %v738 = vadd.f32 %v734, 1e-06
    %v739 = vadd.f32 %v737, 1e-06
    %v740 = vrsqrt.pop %v738
    %v741 = vmul.f32 %v740, %v738
    %v742 = vmul.f32 %v741, %v740
    %v743 = vmul.f32 0.5, %v742
    %v744 = vsub.f32 1.5, %v743
    %v745 = vmul.f32 %v740, %v744
    %vm746 = vweird.f32 %v738
    %vm747 = vweird.f32 %v740
    %vm748 = vmor %vm746, %vm747
    %v749 = vsel %vm748, %v740, %v745
    %v750 = vrsqrt.pop %v739
    %v751 = vmul.f32 %v750, %v739
    %v752 = vmul.f32 %v751, %v750
    %v753 = vmul.f32 0.5, %v752
    %v754 = vsub.f32 1.5, %v753
    %v755 = vmul.f32 %v750, %v754
    %vm756 = vweird.f32 %v739
    %vm757 = vweird.f32 %v750
    %vm758 = vmor %vm756, %vm757
    %v759 = vsel %vm758, %v750, %v755
    %v760 = vmul.f32 %v728, %v749
    %v761 = vmul.f32 %v729, %v759
    %762 = vxpose.xlu0.b32.start [1/16] %v760, 128
    %763 = vxpose.xlu0.b32.cont [2/16] 0.0, 128
    %764 = vxpose.xlu0.b32.cont [3/16] 0.0, 128
    %765 = vxpose.xlu0.b32.cont [4/16] 0.0, 128
    %766 = vxpose.xlu0.b32.cont [5/16] 0.0, 128
    %767 = vxpose.xlu0.b32.cont [6/16] 0.0, 128
    %768 = vxpose.xlu0.b32.cont [7/16] 0.0, 128
    %769 = vxpose.xlu0.b32.cont [8/16] 0.0, 128
    %770 = vxpose.xlu0.b32.cont [9/16] 0.0, 128
    %771 = vxpose.xlu0.b32.cont [10/16] 0.0, 128
    %772 = vxpose.xlu0.b32.cont [11/16] 0.0, 128
    %773 = vxpose.xlu0.b32.cont [12/16] 0.0, 128
    %774 = vxpose.xlu0.b32.cont [13/16] 0.0, 128
    %775 = vxpose.xlu0.b32.cont [14/16] 0.0, 128
    %776 = vxpose.xlu0.b32.cont [15/16] 0.0, 128
    %777 = vxpose.xlu0.b32.end [16/16] 0.0, 128
    %v778 = vpop.trf.xlu0
    %v779 = vpop.trf.xlu0
    %v780 = vpop.trf.xlu0
    %v781 = vpop.trf.xlu0
    %v782 = vpop.trf.xlu0
    %v783 = vpop.trf.xlu0
    %v784 = vpop.trf.xlu0
    %v785 = vpop.trf.xlu0
    %v786 = vpop.trf.xlu0
    %v787 = vpop.trf.xlu0
    %v788 = vpop.trf.xlu0
    %v789 = vpop.trf.xlu0
    %v790 = vpop.trf.xlu0
    %v791 = vpop.trf.xlu0
    %v792 = vpop.trf.xlu0
    %v793 = vpop.trf.xlu0
    %vm794 = vcmask 64512
    %v796 = vsel %vm794, %v778, 0
    %v799 = vsel %vm794, %v779, 0
    %v802 = vsel %vm794, %v780, 0
    %v805 = vsel %vm794, %v781, 0
    %807 = vmatpush.msra.mxu0 0.0
    %808 = vmatpush.msra.mxu0 0.0
    %809 = vmatpush.msra.mxu0 0.0
    %810 = vmatpush.msra.mxu0 0.0
    %811 = vmatpush.msra.mxu0 0.0
    %812 = vmatpush.msra.mxu0 0.0
    %813 = vmatpush.msra.mxu0 0.0
    %814 = vmatpush.msra.mxu0 0.0
    %815 = vmatpush.msra.mxu0 0.0
    %816 = vmatpush.msra.mxu0 0.0
    %817 = vmatpush.msra.mxu0 0.0
    %818 = vmatpush.msra.mxu0 0.0
    %819 = vmatpush.msra.mxu0 0.0
    %820 = vmatpush.msra.mxu0 0.0
    %821 = vmatpush.msra.mxu0 0.0
    %822 = vmatpush.msra.mxu0 %v656
    %823 = vmatmul.f32.gmra.mxu0 %v796
    %v824 = vpop.f32.mrf.mxu0
    %v825 = vadd.f32 0.0, %v824
    %826 = vmatmul.f32.gmra.mxu0 %v799
    %v827 = vpop.f32.mrf.mxu0
    %v828 = vadd.f32 0.0, %v827
    %829 = vmatmul.f32.gmra.mxu0 %v802
    %v830 = vpop.f32.mrf.mxu0
    %v831 = vadd.f32 0.0, %v830
    %832 = vmatmul.f32.gmra.mxu0 %v805
    %v833 = vpop.f32.mrf.mxu0
    %v834 = vadd.f32 0.0, %v833
    %835 = vdwg.mxu0
    %836 = vxpose.xlu0.b32.start [1/16] %v761, 128
    %837 = vxpose.xlu0.b32.cont [2/16] 0.0, 128
    %838 = vxpose.xlu0.b32.cont [3/16] 0.0, 128
    %839 = vxpose.xlu0.b32.cont [4/16] 0.0, 128
    %840 = vxpose.xlu0.b32.cont [5/16] 0.0, 128
    %841 = vxpose.xlu0.b32.cont [6/16] 0.0, 128
    %842 = vxpose.xlu0.b32.cont [7/16] 0.0, 128
    %843 = vxpose.xlu0.b32.cont [8/16] 0.0, 128
    %844 = vxpose.xlu0.b32.cont [9/16] 0.0, 128
    %845 = vxpose.xlu0.b32.cont [10/16] 0.0, 128
    %846 = vxpose.xlu0.b32.cont [11/16] 0.0, 128
    %847 = vxpose.xlu0.b32.cont [12/16] 0.0, 128
    %848 = vxpose.xlu0.b32.cont [13/16] 0.0, 128
    %849 = vxpose.xlu0.b32.cont [14/16] 0.0, 128
    %850 = vxpose.xlu0.b32.cont [15/16] 0.0, 128
    %851 = vxpose.xlu0.b32.end [16/16] 0.0, 128
    %v852 = vpop.trf.xlu0
    %v853 = vpop.trf.xlu0
    %v854 = vpop.trf.xlu0
    %v855 = vpop.trf.xlu0
    %v856 = vpop.trf.xlu0
    %v857 = vpop.trf.xlu0
    %v858 = vpop.trf.xlu0
    %v859 = vpop.trf.xlu0
    %v860 = vpop.trf.xlu0
    %v861 = vpop.trf.xlu0
    %v862 = vpop.trf.xlu0
    %v863 = vpop.trf.xlu0
    %v864 = vpop.trf.xlu0
    %v865 = vpop.trf.xlu0
    %v866 = vpop.trf.xlu0
    %v867 = vpop.trf.xlu0
    %v869 = vsel %vm794, %v852, 0
    %v872 = vsel %vm794, %v853, 0
    %v875 = vsel %vm794, %v854, 0
    %v878 = vsel %vm794, %v855, 0
    %880 = vmatpush.msra.mxu0 0.0
    %881 = vmatpush.msra.mxu0 0.0
    %882 = vmatpush.msra.mxu0 0.0
    %883 = vmatpush.msra.mxu0 0.0
    %884 = vmatpush.msra.mxu0 0.0
    %885 = vmatpush.msra.mxu0 0.0
    %886 = vmatpush.msra.mxu0 0.0
    %887 = vmatpush.msra.mxu0 0.0
    %888 = vmatpush.msra.mxu0 0.0
    %889 = vmatpush.msra.mxu0 0.0
    %890 = vmatpush.msra.mxu0 0.0
    %891 = vmatpush.msra.mxu0 0.0
    %892 = vmatpush.msra.mxu0 0.0
    %893 = vmatpush.msra.mxu0 0.0
    %894 = vmatpush.msra.mxu0 0.0
    %895 = vmatpush.msra.mxu0 %v671
    %896 = vmatmul.f32.gmra.mxu0 %v869
    %v897 = vpop.f32.mrf.mxu0
    %v898 = vadd.f32 0.0, %v897
    %899 = vmatmul.f32.gmra.mxu0 %v872
    %v900 = vpop.f32.mrf.mxu0
    %v901 = vadd.f32 0.0, %v900
    %902 = vmatmul.f32.gmra.mxu0 %v875
    %v903 = vpop.f32.mrf.mxu0
    %v904 = vadd.f32 0.0, %v903
    %905 = vmatmul.f32.gmra.mxu0 %v878
    %v906 = vpop.f32.mrf.mxu0
    %v907 = vadd.f32 0.0, %v906
    %908 = vdwg.mxu0
    %v909 = vadd.f32 %v95, %v825
    %v910 = vadd.f32 %v98, %v828
    %v911 = vadd.f32 %v101, %v831
    %v912 = vadd.f32 %v104, %v834
    %v913 = vadd.f32 %v127, %v898
    %v914 = vadd.f32 %v130, %v901
    %v915 = vadd.f32 %v133, %v904
    %v916 = vadd.f32 %v136, %v907
    %v917 = vmax.f32 %v909, 0.0
    %v918 = vmax.f32 %v910, 0.0
    %v919 = vmax.f32 %v911, 0.0
    %v920 = vmax.f32 %v912, 0.0
    %v921 = vmax.f32 %v913, 0.0
    %v922 = vmax.f32 %v914, 0.0
    %v923 = vmax.f32 %v915, 0.0
    %v924 = vmax.f32 %v916, 0.0
    %v925 = vld [vmem:[%s4] sm:$0xff]
    %v926 = vld [vmem:[%s5] sm:$0xff]
    %928 = vset.pattern.permute.xlu0 0
    %929 = vperm.xlu0 %928, %v926
    %v930 = vpop.permute.xlu0 %929
    %v933 = vsel %vm139, %v925, 0
    %935 = vmatpush.msra.mxu0 0.0
    %936 = vmatpush.msra.mxu0 0.0
    %937 = vmatpush.msra.mxu0 0.0
    %938 = vmatpush.msra.mxu0 0.0
    %939 = vmatpush.msra.mxu0 0.0
    %940 = vmatpush.msra.mxu0 0.0
    %941 = vmatpush.msra.mxu0 0.0
    %942 = vmatpush.msra.mxu0 0.0
    %943 = vmatpush.msra.mxu0 0.0
    %944 = vmatpush.msra.mxu0 0.0
    %945 = vmatpush.msra.mxu0 0.0
    %946 = vmatpush.msra.mxu0 0.0
    %947 = vmatpush.msra.mxu0 %v920
    %948 = vmatpush.msra.mxu0 %v919
    %949 = vmatpush.msra.mxu0 %v918
    %950 = vmatpush.msra.mxu0 %v917
    %951 = vmatmul.f32.gmra.mxu0 %v933
    %v952 = vpop.f32.mrf.mxu0
    %v953 = vadd.f32 %v930, %v952
    %954 = vdwg.mxu0
    %955 = vmatpush.msra.mxu0 0.0
    %956 = vmatpush.msra.mxu0 0.0
    %957 = vmatpush.msra.mxu0 0.0
    %958 = vmatpush.msra.mxu0 0.0
    %959 = vmatpush.msra.mxu0 0.0
    %960 = vmatpush.msra.mxu0 0.0
    %961 = vmatpush.msra.mxu0 0.0
    %962 = vmatpush.msra.mxu0 0.0
    %963 = vmatpush.msra.mxu0 0.0
    %964 = vmatpush.msra.mxu0 0.0
    %965 = vmatpush.msra.mxu0 0.0
    %966 = vmatpush.msra.mxu0 0.0
    %967 = vmatpush.msra.mxu0 %v924
    %968 = vmatpush.msra.mxu0 %v923
    %969 = vmatpush.msra.mxu0 %v922
    %970 = vmatpush.msra.mxu0 %v921
    %971 = vmatmul.f32.gmra.mxu0 %v933
    %v972 = vpop.f32.mrf.mxu0
    %v973 = vadd.f32 %v930, %v972
    %974 = vdwg.mxu0
    %975 = vst.msk [vmem:[#allocation2] sm:$0xff] %vm183, %v953
    %976 = vst.msk [vmem:[#allocation2 + $0x8] sm:$0xff] %vm183, %v973
    // Predicated region
    $region26: #{tpu_custom_call.1} parent=1 // pred_check
      _
    $region27: #{tpu_custom_call.1} parent=1 // pred_check_branch
      %978 = sbr.rel (0) target = $region29
    $region28: #{tpu_custom_call.1} parent=1 // pred_region
      %980 = vsyncadd [#allocation3], 0
      %s981 = sshll.u32 [#allocation2], 4
      %s982 = int_to_ptr.vmem [resolvable:$true] %s981
      %s983 = sshll.u32 %s6, 4
      %s984 = int_to_ptr.hbm [resolvable:$true] %s983
      %989 = dma.vmem_to_hbm [thread:$0]  %s982, 256, %s984, [#allocation3], 128, 128, 8
    $region29: #{tpu_custom_call.1} parent=1 // pred_fallthru
      _
    // Predicated region
    $region30: #{tpu_custom_call.1} parent=1 // pred_check
      _
    $region31: #{tpu_custom_call.1} parent=1 // pred_check_branch
      %991 = sbr.rel (0) target = $region33
    $region32: #{tpu_custom_call.1} parent=1 // pred_region
      %993 = dma.done [#allocation3], 256
    $region33: #{tpu_custom_call.1} parent=1 // pred_fallthru
      _
    %994 = vsyncpa [#allocation3], 1

</llo_original>
